<compile_context>
chip_gen: v6e
topology: v6e:2x2x1
jax: 0.10.0
libtpu: 0.0.40
codegen_flags: <defaults>
</compile_context>

<pallas_src>
import jax
import jax.numpy as jnp
from jax import lax
from jax.experimental import pallas as pl
from jax.experimental.pallas import tpu as pltpu

LANE = 128            # lane width (last dim)
SUB = 8               # sublane count (accumulator rows)
MAX_TILE_ROWS = 2048  # rows per grid step; 2048*128*4B = 1 MiB per input buffer


def _round_up(a, b):
    return ((a + b - 1) // b) * b


def charbonnier_loss(x, y, eps=1e-6):
    """Pallas implementation of CharbonnierLoss.forward (returns a scalar)."""
    assert x.shape == y.shape
    n = int(x.size)

    x_flat = x.reshape(-1)
    y_flat = y.reshape(-1)

    rows_total = n // LANE
    rem = n - rows_total * LANE

    # Sub-128-element tail: handled in plain JAX (tiny, avoids padding copies).
    if rem:
        xt = x_flat[rows_total * LANE:].astype(jnp.float32)
        yt = y_flat[rows_total * LANE:].astype(jnp.float32)
        dt = xt - yt
        tail = jnp.sum(jnp.sqrt(dt * dt + jnp.float32(eps)))
    else:
        tail = jnp.float32(0.0)

    if rows_total == 0:
        return tail

    if rem:
        x_main = x_flat[: rows_total * LANE]
        y_main = y_flat[: rows_total * LANE]
    else:
        x_main, y_main = x_flat, y_flat
    # Contiguous reshape -> lane-dense 2D slab, no HBM copy.
    x2d = x_main.reshape(rows_total, LANE)
    y2d = y_main.reshape(rows_total, LANE)

    tile_rows = min(MAX_TILE_ROWS, _round_up(rows_total, SUB))
    blocks_total = pl.cdiv(rows_total, tile_rows)
    # Shard across 2 TensorCores (v7x) when there is enough work; on 1-TC chips
    # the "parallel" axis just runs serially.
    num_cores = 2 if blocks_total >= 2 else 1
    blocks_per_core = pl.cdiv(blocks_total, num_cores)

    def in_map(c, i):
        # Clamp so overflow steps (when blocks_total doesn't split evenly) re-read
        # a valid block; their contribution is masked to zero in the kernel.
        return (jnp.minimum(c * blocks_per_core + i, blocks_total - 1), 0)

    def kernel(x_ref, y_ref, out_ref):
        c = pl.program_id(0)
        i = pl.program_id(1)

        @pl.when(i == 0)
        def _():
            out_ref[...] = jnp.zeros_like(out_ref)

        vb = c * blocks_per_core + i          # virtual (unclamped) block index
        row_off = vb * tile_rows

        def tile_val():
            diff = x_ref[...].astype(jnp.float32) - y_ref[...].astype(jnp.float32)
            return jnp.sqrt(diff * diff + jnp.float32(eps))

        def accumulate(val):
            # (tile_rows, 128) -> (G, 8, 128), sum over G = pure vreg (VPU) adds.
            out_ref[...] += val.reshape(-1, SUB, LANE).sum(axis=0, keepdims=True)

        is_full = (row_off + tile_rows) <= rows_total

        @pl.when(is_full)
        def _():
            accumulate(tile_val())

        @pl.when(jnp.logical_not(is_full))
        def _():
            rid = row_off + lax.broadcasted_iota(jnp.int32, (tile_rows, LANE), 0)
            accumulate(jnp.where(rid < rows_total, tile_val(), jnp.float32(0.0)))

    partials = pl.pallas_call(
        kernel,
        out_shape=jax.ShapeDtypeStruct((num_cores, SUB, LANE), jnp.float32),
        grid_spec=pltpu.PrefetchScalarGridSpec(
            num_scalar_prefetch=0,
            grid=(num_cores, blocks_per_core),
            in_specs=[
                pl.BlockSpec((tile_rows, LANE), in_map),
                pl.BlockSpec((tile_rows, LANE), in_map),
            ],
            out_specs=pl.BlockSpec((1, SUB, LANE), lambda c, i: (c, 0, 0)),
        ),
        compiler_params=pltpu.CompilerParams(
            dimension_semantics=("parallel", "arbitrary"),
        ),
    )(x2d, y2d)

    # Single scalar reduction of the per-core (8,128) partials, plus JAX tail.
    return jnp.sum(partials) + tail


if __name__ == "__main__":
    key = jax.random.PRNGKey(0)
    kx, ky = jax.random.split(key)
    # Module forward implies two same-shape NCHW tensors.
    x = jax.random.normal(kx, (2, 4, 16, 16), dtype=jnp.float32)
    y = jax.random.normal(ky, (2, 4, 16, 16), dtype=jnp.float32)

    loss = charbonnier_loss(x, y, eps=1e-6)
    jax.block_until_ready(loss)

    # Reference check (plain JAX, same math as the PyTorch module:
    # sqrt(diff^2 + eps), NOT eps^2).
    diff = x - y
    ref = jnp.sum(jnp.sqrt(diff * diff + 1e-6))
    assert jnp.allclose(loss, ref, rtol=1e-5, atol=1e-4), (loss, ref)

    print("KERNEL_OK")
</pallas_src>

<mosaic_0001>
module attributes {stable_mosaic.version = 11 : i64} {
  func.func @kernel(%arg0: i32, %arg1: i32, %arg2: memref<16x128xf32, #tpu.memory_space<vmem>>, %arg3: memref<16x128xf32, #tpu.memory_space<vmem>>, %arg4: memref<1x8x128xf32, #tpu.memory_space<vmem>>) attributes {dimension_semantics = [#tpu.dimension_semantics<parallel>, #tpu.dimension_semantics<arbitrary>], iteration_bounds = array<i64: 1, 1>, scalar_prefetch = 0 : i64, scratch_operands = 0 : i64, tpu.core_type = #tpu.core_type<tc>, window_params = [{transform_indices = @transform_0, window_bounds = array<i64: 16, 128>}, {transform_indices = @transform_1, window_bounds = array<i64: 16, 128>}, {transform_indices = @transform_2, window_bounds = array<i64: 1, 8, 128>}]} {
    %c0_i32 = arith.constant 0 : i32
    %0 = arith.cmpi eq, %arg1, %c0_i32 : i32
    %1 = arith.extui %0 : i1 to i32
    %c0_i32_0 = arith.constant 0 : i32
    %2 = arith.cmpi ne, %1, %c0_i32_0 : i32
    scf.if %2 {
      %cst = arith.constant 0.000000e+00 : f32
      %13 = vector.broadcast %cst : f32 to vector<1x8x128xf32>
      %c0 = arith.constant 0 : index
      %c0_5 = arith.constant 0 : index
      %c0_6 = arith.constant 0 : index
      %14 = vector.load %arg4[%c0, %c0_5, %c0_6] : memref<1x8x128xf32, #tpu.memory_space<vmem>>, vector<1x8x128xf32>
      tpu.vector_store %arg4[%c0, %c0_5, %c0_6], %13 {strides = array<i32>} : memref<1x8x128xf32, #tpu.memory_space<vmem>>, vector<1x8x128xf32>,
    } else {
    }
    %c1_i32 = arith.constant 1 : i32
    %3 = arith.muli %arg0, %c1_i32 : i32
    %4 = arith.addi %3, %arg1 : i32
    %c16_i32 = arith.constant 16 : i32
    %5 = arith.muli %4, %c16_i32 : i32
    %c16_i32_1 = arith.constant 16 : i32
    %6 = arith.addi %5, %c16_i32_1 : i32
    %c16_i32_2 = arith.constant 16 : i32
    %7 = arith.cmpi sle, %6, %c16_i32_2 : i32
    %8 = arith.extui %7 : i1 to i32
    %c0_i32_3 = arith.constant 0 : i32
    %9 = arith.cmpi ne, %8, %c0_i32_3 : i32
    scf.if %9 {
      %c0 = arith.constant 0 : index
      %c0_5 = arith.constant 0 : index
      %13 = vector.load %arg2[%c0, %c0_5] : memref<16x128xf32, #tpu.memory_space<vmem>>, vector<16x128xf32>
      %c0_6 = arith.constant 0 : index
      %c0_7 = arith.constant 0 : index
      %14 = vector.load %arg3[%c0_6, %c0_7] : memref<16x128xf32, #tpu.memory_space<vmem>>, vector<16x128xf32>
      %15 = arith.subf %13, %14 : vector<16x128xf32>
      %16 = arith.mulf %15, %15 : vector<16x128xf32>
      %cst = arith.constant 9.99999997E-7 : f32
      %17 = vector.broadcast %cst : f32 to vector<16x128xf32>
      %18 = arith.addf %16, %17 : vector<16x128xf32>
      %19 = math.sqrt %18 : vector<16x128xf32>
      %c0_8 = arith.constant 0 : index
      %c0_9 = arith.constant 0 : index
      %c0_10 = arith.constant 0 : index
      %20 = vector.load %arg4[%c0_8, %c0_9, %c0_10] : memref<1x8x128xf32, #tpu.memory_space<vmem>>, vector<1x8x128xf32>
      %21 = vector.shape_cast %19 : vector<16x128xf32> to vector<2x8x128xf32>
      %cst_11 = arith.constant dense<0.000000e+00> : vector<8x128xf32>
      %22 = vector.multi_reduction <add>, %21, %cst_11 [0] : vector<2x8x128xf32> to vector<8x128xf32>
      %23 = vector.shape_cast %22 : vector<8x128xf32> to vector<1x8x128xf32>
      %24 = arith.addf %20, %23 : vector<1x8x128xf32>
      %c0_12 = arith.constant 0 : index
      %c0_13 = arith.constant 0 : index
      %c0_14 = arith.constant 0 : index
      %25 = vector.load %arg4[%c0_12, %c0_13, %c0_14] : memref<1x8x128xf32, #tpu.memory_space<vmem>>, vector<1x8x128xf32>
      tpu.vector_store %arg4[%c0_12, %c0_13, %c0_14], %24 {strides = array<i32>} : memref<1x8x128xf32, #tpu.memory_space<vmem>>, vector<1x8x128xf32>,
    } else {
    }
    %true = arith.constant true
    %10 = arith.xori %7, %true : i1
    %11 = arith.extui %10 : i1 to i32
    %c0_i32_4 = arith.constant 0 : i32
    %12 = arith.cmpi ne, %11, %c0_i32_4 : i32
    scf.if %12 {
      %13 = tpu.iota {dimensions = array<i32: 0>} : vector<16x128xi32>
      %14 = vector.broadcast %5 : i32 to vector<16x128xi32>
      %15 = arith.addi %14, %13 : vector<16x128xi32>
      %c16_i32_5 = arith.constant 16 : i32
      %16 = vector.broadcast %c16_i32_5 : i32 to vector<16x128xi32>
      %17 = arith.cmpi slt, %15, %16 : vector<16x128xi32>
      %c0 = arith.constant 0 : index
      %c0_6 = arith.constant 0 : index
      %18 = vector.load %arg2[%c0, %c0_6] : memref<16x128xf32, #tpu.memory_space<vmem>>, vector<16x128xf32>
      %c0_7 = arith.constant 0 : index
      %c0_8 = arith.constant 0 : index
      %19 = vector.load %arg3[%c0_7, %c0_8] : memref<16x128xf32, #tpu.memory_space<vmem>>, vector<16x128xf32>
      %20 = arith.subf %18, %19 : vector<16x128xf32>
      %21 = arith.mulf %20, %20 : vector<16x128xf32>
      %cst = arith.constant 9.99999997E-7 : f32
      %22 = vector.broadcast %cst : f32 to vector<16x128xf32>
      %23 = arith.addf %21, %22 : vector<16x128xf32>
      %24 = math.sqrt %23 : vector<16x128xf32>
      %cst_9 = arith.constant 0.000000e+00 : f32
      %25 = vector.broadcast %cst_9 : f32 to vector<16x128xf32>
      %26 = arith.select %17, %24, %25 : vector<16x128xi1>, vector<16x128xf32>
      %c0_10 = arith.constant 0 : index
      %c0_11 = arith.constant 0 : index
      %c0_12 = arith.constant 0 : index
      %27 = vector.load %arg4[%c0_10, %c0_11, %c0_12] : memref<1x8x128xf32, #tpu.memory_space<vmem>>, vector<1x8x128xf32>
      %28 = vector.shape_cast %26 : vector<16x128xf32> to vector<2x8x128xf32>
      %cst_13 = arith.constant dense<0.000000e+00> : vector<8x128xf32>
      %29 = vector.multi_reduction <add>, %28, %cst_13 [0] : vector<2x8x128xf32> to vector<8x128xf32>
      %30 = vector.shape_cast %29 : vector<8x128xf32> to vector<1x8x128xf32>
      %31 = arith.addf %27, %30 : vector<1x8x128xf32>
      %c0_14 = arith.constant 0 : index
      %c0_15 = arith.constant 0 : index
      %c0_16 = arith.constant 0 : index
      %32 = vector.load %arg4[%c0_14, %c0_15, %c0_16] : memref<1x8x128xf32, #tpu.memory_space<vmem>>, vector<1x8x128xf32>
      tpu.vector_store %arg4[%c0_14, %c0_15, %c0_16], %31 {strides = array<i32>} : memref<1x8x128xf32, #tpu.memory_space<vmem>>, vector<1x8x128xf32>,
    } else {
    }
    return
  }
  func.func @transform_0(%arg0: i32, %arg1: i32) -> (i32, i32) {
    %c1_i32 = arith.constant 1 : i32
    %0 = arith.muli %arg0, %c1_i32 : i32
    %1 = arith.addi %0, %arg1 : i32
    %c0_i32 = arith.constant 0 : i32
    %2 = arith.minsi %1, %c0_i32 : i32
    %c0_i32_0 = arith.constant 0 : i32
    %c0_i32_1 = arith.constant 0 : i32
    return %2, %c0_i32_0 : i32, i32
  }
  func.func @transform_1(%arg0: i32, %arg1: i32) -> (i32, i32) {
    %c1_i32 = arith.constant 1 : i32
    %0 = arith.muli %arg0, %c1_i32 : i32
    %1 = arith.addi %0, %arg1 : i32
    %c0_i32 = arith.constant 0 : i32
    %2 = arith.minsi %1, %c0_i32 : i32
    %c0_i32_0 = arith.constant 0 : i32
    %c0_i32_1 = arith.constant 0 : i32
    return %2, %c0_i32_0 : i32, i32
  }
  func.func @transform_2(%arg0: i32, %arg1: i32) -> (i32, i32, i32) {
    %c0_i32 = arith.constant 0 : i32
    %c0_i32_0 = arith.constant 0 : i32
    %c0_i32_1 = arith.constant 0 : i32
    return %arg0, %c0_i32, %c0_i32_0 : i32, i32, i32
  }
}

</mosaic_0001>

<llo_original>
// kernel: tpu_custom_call.1
$region0: #{tpu_custom_call.1}
  #allocation0 [shape = 'u32[]', space=smem, size = 0x4, offset = 0x4, fixed_abs, tag = 'smem constant byte address 0x4 - core index']
  #allocation1 [shape = 'u32[144,128]{1,0:T(1,128)}', space=vmem, size = 0x12000, scoped, tag = 'internal scratch']
  %s0 = inlined_call_operand.hbm [shape: f32[16,128], index: 0, kind: input, shape index: {}]
  %s1 = inlined_call_operand.hbm [shape: f32[16,128], index: 1, kind: input, shape index: {}]
  %s2 = inlined_call_operand.hbm [shape: f32[1,8,128], index: 2, kind: output, shape index: {}]
  %s3 = sld [smem:[#allocation0]]
  $region38: #{tpu_custom_call.1} parent=0
    _
  %s5 = ssub.s32 1, %s3
  %s6 = scalar_select 0, %s5, %s3
  $region1: #{tpu_custom_call.1} parent=0
    #allocation2 [shape = 'u8[8192]{0}', space=vmem, size = 0x2000, scoped, tag = 'input window, operand 0, single buffered']
    #allocation3 [shape = 's32[1]{0}', space=sflag, size = 0x4, scoped, tag = 'scoped memory for tpu_custom_call.1']
    #allocation4 [shape = 's32[1]{0}', space=sflag, size = 0x4, scoped, tag = 'scoped memory for tpu_custom_call.1']
    #allocation5 [shape = 'u8[8192]{0}', space=vmem, size = 0x2000, scoped, tag = 'input window, operand 1, single buffered']
    #allocation6 [shape = 's32[1]{0}', space=sflag, size = 0x4, scoped, tag = 'scoped memory for tpu_custom_call.1']
    #allocation7 [shape = 'u8[4096]{0}', space=vmem, size = 0x1000, scoped, tag = 'output window, operand 0, single buffered']
    %7 = vsyncpa [#allocation3], 0
    %8 = vsyncpa [#allocation6], 0
    %9 = vsyncpa [#allocation4], 0
    // Predicated region
    $region2: #{tpu_custom_call.1} parent=1 // pred_check
      _
    $region3: #{tpu_custom_call.1} parent=1 // pred_check_branch
      %11 = sbr.rel (0) target = $region5
    $region4: #{tpu_custom_call.1} parent=1 // pred_region
      %s12 = sadd.s32 0, 0
      %p13 = scmp.lt.s32.totalorder %s12, 0
      %s14 = scalar_select %p13, %s12, 0
      %s15 = smul.u32 2, %s14
      %s17 = ssub.s32 256, 256
      %18 = vsyncadd [#allocation3], %s17
      %s19 = smul.addr %s15, 128
      %s20 = scalar_lea.hbm %s0, %s19
      %s21 = sshll.u32 [#allocation2], 4
      %s22 = int_to_ptr.vmem [resolvable:$true] %s21
      %27 = dma.hbm_to_vmem [thread:$0]  %s20, 256, %s22, [#allocation3], 128, 128, 8
    $region5: #{tpu_custom_call.1} parent=1 // pred_fallthru
      _
    // Predicated region
    $region6: #{tpu_custom_call.1} parent=1 // pred_check
      _
    $region7: #{tpu_custom_call.1} parent=1 // pred_check_branch
      %29 = sbr.rel (0) target = $region9
    $region8: #{tpu_custom_call.1} parent=1 // pred_region
      %s30 = sadd.s32 0, 0
      %p31 = scmp.lt.s32.totalorder %s30, 0
      %s32 = scalar_select %p31, %s30, 0
      %s33 = smul.u32 2, %s32
      %s35 = ssub.s32 256, 256
      %36 = vsyncadd [#allocation6], %s35
      %s37 = smul.addr %s33, 128
      %s38 = scalar_lea.hbm %s1, %s37
      %s39 = sshll.u32 [#allocation5], 4
      %s40 = int_to_ptr.vmem [resolvable:$true] %s39
      %45 = dma.hbm_to_vmem [thread:$0]  %s38, 256, %s40, [#allocation6], 128, 128, 8
    $region9: #{tpu_custom_call.1} parent=1 // pred_fallthru
      _
    // Predicated region
    $region10: #{tpu_custom_call.1} parent=1 // pred_check
      _
    $region11: #{tpu_custom_call.1} parent=1 // pred_check_branch
      %47 = sbr.rel (0) target = $region13
    $region12: #{tpu_custom_call.1} parent=1 // pred_region
      %48 = dma.done [#allocation3], 256
    $region13: #{tpu_custom_call.1} parent=1 // pred_fallthru
      _
    // Predicated region
    $region14: #{tpu_custom_call.1} parent=1 // pred_check
      _
    $region15: #{tpu_custom_call.1} parent=1 // pred_check_branch
      %50 = sbr.rel (0) target = $region17
    $region16: #{tpu_custom_call.1} parent=1 // pred_region
      %51 = dma.done [#allocation6], 256
    $region17: #{tpu_custom_call.1} parent=1 // pred_fallthru
      _
    %s52 = sadd.s32 0, 0
    %p53 = scmp.lt.s32.totalorder %s52, 0
    %s54 = scalar_select %p53, %s52, 0
    %s55 = smul.u32 2, %s54
    %s56 = sadd.s32 0, 0
    %p57 = scmp.lt.s32.totalorder %s56, 0
    %s58 = scalar_select %p57, %s56, 0
    %s59 = smul.u32 2, %s58
    %p60 = scmp.eq.s32.totalorder 0, 0
    // Predicated region
    $region18: #{tpu_custom_call.1} parent=1 // pred_check
      %p61 = pneg %p60
    $region19: #{tpu_custom_call.1} parent=1 // pred_check_branch
      %63 = sbr.rel (%p61) target = $region21
    $region20: #{tpu_custom_call.1} parent=1 // pred_region
      %64 = vst [vmem:[#allocation7] sm:$0xff] 0.0
    $region21: #{tpu_custom_call.1} parent=1 // pred_fallthru
      _
    %s65 = sadd.s32 0, 0
    %s66 = smul.u32 %s65, 16
    %s67 = sadd.s32 %s66, 16
    %p68 = scmp.le.s32.totalorder %s67, 16
    // Predicated region
    $region22: #{tpu_custom_call.1} parent=1 // pred_check
      %p69 = pneg %p68
    $region23: #{tpu_custom_call.1} parent=1 // pred_check_branch
      %71 = sbr.rel (%p69) target = $region25
    $region24: #{tpu_custom_call.1} parent=1 // pred_region
      %v72 = vld [vmem:[#allocation2] sm:$0xff]
      %v73 = vld [vmem:[#allocation2 + $0x8] sm:$0xff]
      %v74 = vld [vmem:[#allocation5] sm:$0xff]
      %v75 = vld [vmem:[#allocation5 + $0x8] sm:$0xff]
      %v76 = vsub.f32 %v72, %v74
      %v77 = vsub.f32 %v73, %v75
      %v78 = vmul.f32 %v76, %v76
      %v79 = vmul.f32 %v77, %v77
      %v80 = vadd.f32 %v78, 1e-06
      %v81 = vadd.f32 %v79, 1e-06
      %v82 = vrsqrt.pop %v80
      %v83 = vmul.f32 %v80, %v82
      %vm84 = vcmp.eq.f32.partialorder %v80, inf
      %v85 = vsel %vm84, %v80, %v83
      %vm86 = vcmp.eq.f32.partialorder %v80, 0.0
      %v87 = vand.u32 %v80, 2147483648
      %v88 = vsel %vm86, %v87, %v85
      %v89 = vrsqrt.pop %v81
      %v90 = vmul.f32 %v81, %v89
      %vm91 = vcmp.eq.f32.partialorder %v81, inf
      %v92 = vsel %vm91, %v81, %v90
      %vm93 = vcmp.eq.f32.partialorder %v81, 0.0
      %v94 = vand.u32 %v81, 2147483648
      %v95 = vsel %vm93, %v94, %v92
      %v96 = vld [vmem:[#allocation7] sm:$0xff]
      %v97 = vadd.f32 %v88, %v95
      %v98 = vadd.f32 %v96, %v97
      %99 = vst [vmem:[#allocation7] sm:$0xff] %v98
    $region25: #{tpu_custom_call.1} parent=1 // pred_fallthru
      _
    %p100 = scmp.gt.s32.totalorder %s67, 16
    // Predicated region
    $region26: #{tpu_custom_call.1} parent=1 // pred_check
      %p101 = pneg %p100
    $region27: #{tpu_custom_call.1} parent=1 // pred_check_branch
      %103 = sbr.rel (%p101) target = $region29
    $region28: #{tpu_custom_call.1} parent=1 // pred_region
      %v104 = vlaneseq
      %v105 = vshrl.u32 %v104, 7
      %v106 = vadd.s32 %v105, 8
      %v107 = vstv %s66
      %v108 = vadd.s32 %v107, %v105
      %v109 = vadd.s32 %v107, %v106
      %vm110 = vcmp.lt.s32.totalorder %v108, 16
      %vm111 = vcmp.lt.s32.totalorder %v109, 16
      %v112 = vld [vmem:[#allocation2] sm:$0xff]
      %v113 = vld [vmem:[#allocation2 + $0x8] sm:$0xff]
      %v114 = vld [vmem:[#allocation5] sm:$0xff]
      %v115 = vld [vmem:[#allocation5 + $0x8] sm:$0xff]
      %v116 = vsub.f32 %v112, %v114
      %v117 = vsub.f32 %v113, %v115
      %v118 = vmul.f32 %v116, %v116
      %v119 = vmul.f32 %v117, %v117
      %v120 = vadd.f32 %v118, 1e-06
      %v121 = vadd.f32 %v119, 1e-06
      %v122 = vrsqrt.pop %v120
      %v123 = vmul.f32 %v120, %v122
      %vm124 = vcmp.eq.f32.partialorder %v120, inf
      %v125 = vsel %vm124, %v120, %v123
      %vm126 = vcmp.eq.f32.partialorder %v120, 0.0
      %v127 = vand.u32 %v120, 2147483648
      %v128 = vsel %vm126, %v127, %v125
      %v129 = vrsqrt.pop %v121
      %v130 = vmul.f32 %v121, %v129
      %vm131 = vcmp.eq.f32.partialorder %v121, inf
      %v132 = vsel %vm131, %v121, %v130
      %vm133 = vcmp.eq.f32.partialorder %v121, 0.0
      %v134 = vand.u32 %v121, 2147483648
      %v135 = vsel %vm133, %v134, %v132
      %v136 = vsel %vm110, %v128, 0.0
      %v137 = vsel %vm111, %v135, 0.0
      %v138 = vld [vmem:[#allocation7] sm:$0xff]
      %v139 = vadd.f32 %v136, %v137
      %v140 = vadd.f32 %v138, %v139
      %141 = vst [vmem:[#allocation7] sm:$0xff] %v140
    $region29: #{tpu_custom_call.1} parent=1 // pred_fallthru
      _
    // Predicated region
    $region30: #{tpu_custom_call.1} parent=1 // pred_check
      _
    $region31: #{tpu_custom_call.1} parent=1 // pred_check_branch
      %143 = sbr.rel (0) target = $region33
    $region32: #{tpu_custom_call.1} parent=1 // pred_region
      %s145 = ssub.s32 128, 128
      %146 = vsyncadd [#allocation4], %s145
      %s148 = sshll.u32 [#allocation7], 4
      %s149 = int_to_ptr.vmem [resolvable:$true] %s148
      %151 = dma.vmem_to_hbm [thread:$0]  %s149, 128, %s2, [#allocation4]
    $region33: #{tpu_custom_call.1} parent=1 // pred_fallthru
      _
    // Predicated region
    $region34: #{tpu_custom_call.1} parent=1 // pred_check
      _
    $region35: #{tpu_custom_call.1} parent=1 // pred_check_branch
      %153 = sbr.rel (0) target = $region37
    $region36: #{tpu_custom_call.1} parent=1 // pred_region
      %154 = dma.done [#allocation4], 128
    $region37: #{tpu_custom_call.1} parent=1 // pred_fallthru
      _
    %155 = vsyncpa [#allocation3], 1
    %156 = vsyncpa [#allocation6], 1
    %157 = vsyncpa [#allocation4], 1

</llo_original>
